<compile_context>
chip_gen: v7x
topology: tpu7x:2x2x1
jax: 0.10.0
libtpu: 0.0.40
codegen_flags: <defaults>
</compile_context>

<pallas_src>
import math

import jax
import jax.numpy as jnp
from jax import lax
from jax.experimental import pallas as pl
from jax.experimental.pallas import tpu as pltpu


def _sign(v):
    # torch.sign semantics (sign(0) == 0); written with where so Mosaic lowers it.
    return jnp.where(v > 0.0, 1.0, jnp.where(v < 0.0, -1.0, 0.0))


# ----------------------------- Pallas kernels -----------------------------
# Layout inside the kernels: channels C on sublanes, flattened spatial M on lanes.
# Per-channel parameters are (C, 1) columns broadcast along the lane (M) dimension.

def _stage1_kernel(cols_ref, w_ref, sc_ref, p_ref, out1_ref, a2_ref):
    # conv1 (bf16 MXU matmul, lane-dense) + bn1(eval, weight scale folded) +
    # shortcut1 + s11 + PReLU1 + s12; also emits the binarized conv2 input (s20+sign).
    y = jnp.dot(w_ref[...], cols_ref[...], preferred_element_type=jnp.float32)
    p = p_ref[...]
    scale, shift = p[:, 0:1], p[:, 1:2]
    b11, al1 = p[:, 2:3], p[:, 3:4]
    b12, b20 = p[:, 4:5], p[:, 5:6]
    y = y * scale + shift                      # bn1 (eval) with sw folded into scale
    y = y + sc_ref[...]                        # += shortcut1(x)
    y = y + b11                                # s11
    y = jnp.where(y > 0.0, y, al1 * y)         # PReLU1
    y = y + b12                                # s12
    out1_ref[...] = y
    a2_ref[...] = _sign(y + b20).astype(a2_ref.dtype)   # s20 + binarize (bf16, exact)


def _stage2_kernel(cols_ref, w_ref, x1_ref, p_ref, o_ref):
    # conv2 (bf16 MXU matmul) + bn2 + residual x1 + s21 + PReLU2 + s22.
    y = jnp.dot(w_ref[...], cols_ref[...], preferred_element_type=jnp.float32)
    p = p_ref[...]
    scale, shift = p[:, 0:1], p[:, 1:2]
    b21, al2, b22 = p[:, 2:3], p[:, 3:4], p[:, 4:5]
    y = y * scale + shift                      # bn2 (eval) with sw folded into scale
    y = y + x1_ref[...]                        # += shortcut2(out) (identity, p2 == 0)
    y = y + b21                                # s21
    y = jnp.where(y > 0.0, y, al2 * y)         # PReLU2
    y = y + b22                                # s22
    o_ref[...] = y


# ----------------------------- glue helpers -----------------------------

_VMEM_LIMIT = 32 * 1024 * 1024          # explicit scoped-VMEM limit (safe on v5e..v7x)
_TILE_BUDGET = 12 * 1024 * 1024         # budget for the double-buffered streamed tiles


def _round_up(v, m):
    return -(-v // m) * m


def _choose_tile(mp, bytes_per_lane):
    # Largest lane tile (multiple of 128) that divides padded M and whose
    # double-buffered streamed working set fits the VMEM budget.
    for t in (2048, 1024, 512, 384, 256, 128):
        if mp % t == 0 and 2 * t * bytes_per_lane <= _TILE_BUDGET:
            return t
    return 128


def _pad_lanes(a, mp):
    m = a.shape[-1]
    if mp != m:
        a = jnp.pad(a, ((0, 0), (0, mp - m)))
    return a


def _im2col_cm(a_cnhw, stride):
    """3x3 / pad=1 im2col of a channel-major (C, N, H, W) activation.

    Returns (9*C, N*Ho*Wo); rows ordered (dy, dx, c), columns ordered (n, ho, wo).
    """
    c, n, h, w = a_cnhw.shape
    ho = (h - 1) // stride + 1
    wo = (w - 1) // stride + 1
    ap = jnp.pad(a_cnhw, ((0, 0), (0, 0), (1, 1), (1, 1)))
    taps = []
    for dy in range(3):
        for dx in range(3):
            taps.append(ap[:, :, dy:dy + (ho - 1) * stride + 1:stride,
                              dx:dx + (wo - 1) * stride + 1:stride])
    cols = jnp.stack(taps, axis=0)                     # (9, c, n, ho, wo)
    return cols.reshape(9 * c, n * ho * wo), ho, wo


def _binarize_weight_parts(w):
    """IR-Net weight binarization split into (sign(+/-1) part, per-channel p.o.2 scale)."""
    co = w.shape[0]
    wf = w.reshape(co, -1)
    bw = wf - jnp.mean(wf, axis=1, keepdims=True)
    bw = bw / jnp.std(bw, axis=1, ddof=1, keepdims=True)        # torch unbiased std
    sw = 2.0 ** jnp.round(jnp.log2(jnp.mean(jnp.abs(bw), axis=1)))
    return jnp.sign(bw).reshape(w.shape), sw


def _binarize_weight(w):
    wsign, sw = _binarize_weight_parts(w)
    return wsign * sw[:, None, None, None]


def _wsign_to_matT(wsign):
    # (Cout, Cin, 3, 3) -> (Cout, 9*Cin) bf16, columns ordered (dy, dx, ci)
    co, ci, kh, kw = wsign.shape
    return jnp.transpose(wsign, (0, 2, 3, 1)).reshape(co, kh * kw * ci).astype(jnp.bfloat16)


def _bn_fold(gamma, beta, mean, var, eps=1e-5):
    scale = gamma / jnp.sqrt(var + eps)
    return scale, beta - mean * scale


# ----------------------------- kernel wrappers -----------------------------

def _run_stage1(cols_t, w_t, sc, pvec):
    k, m = cols_t.shape
    c = w_t.shape[0]
    pcols = pvec.shape[1]
    mp = _round_up(m, 128)
    # streamed bytes per lane: cols bf16 + shortcut f32 + out1 f32 + a2 bf16
    tm = _choose_tile(mp, 2 * k + 4 * c + 4 * c + 2 * c)
    cols_p = _pad_lanes(cols_t, mp)
    sc_p = _pad_lanes(sc, mp)
    out1, a2 = pl.pallas_call(
        _stage1_kernel,
        out_shape=(jax.ShapeDtypeStruct((c, mp), jnp.float32),
                   jax.ShapeDtypeStruct((c, mp), jnp.bfloat16)),
        grid=(mp // tm,),
        in_specs=[pl.BlockSpec((k, tm), lambda i: (0, i)),
                  pl.BlockSpec((c, k), lambda i: (0, 0)),
                  pl.BlockSpec((c, tm), lambda i: (0, i)),
                  pl.BlockSpec((c, pcols), lambda i: (0, 0))],
        out_specs=(pl.BlockSpec((c, tm), lambda i: (0, i)),
                   pl.BlockSpec((c, tm), lambda i: (0, i))),
        compiler_params=pltpu.CompilerParams(
            dimension_semantics=("parallel",),
            vmem_limit_bytes=_VMEM_LIMIT),
    )(cols_p, w_t, sc_p, pvec)
    return out1[:, :m], a2[:, :m]


def _run_stage2(cols_t, w_t, x1, pvec):
    k, m = cols_t.shape
    c = w_t.shape[0]
    pcols = pvec.shape[1]
    mp = _round_up(m, 128)
    # streamed bytes per lane: cols bf16 + residual f32 + out f32
    tm = _choose_tile(mp, 2 * k + 4 * c + 4 * c)
    cols_p = _pad_lanes(cols_t, mp)
    x1_p = _pad_lanes(x1, mp)
    out = pl.pallas_call(
        _stage2_kernel,
        out_shape=jax.ShapeDtypeStruct((c, mp), jnp.float32),
        grid=(mp // tm,),
        in_specs=[pl.BlockSpec((k, tm), lambda i: (0, i)),
                  pl.BlockSpec((c, k), lambda i: (0, 0)),
                  pl.BlockSpec((c, tm), lambda i: (0, i)),
                  pl.BlockSpec((c, pcols), lambda i: (0, 0))],
        out_specs=pl.BlockSpec((c, tm), lambda i: (0, i)),
        compiler_params=pltpu.CompilerParams(
            dimension_semantics=("parallel",),
            vmem_limit_bytes=_VMEM_LIMIT),
    )(cols_p, w_t, x1_p, pvec)
    return out[:, :m]


# ----------------------------- full forward -----------------------------

def basic_block_1w1a_forward(x_nchw, params, in_planes, planes, stride=1):
    n, cin, h, w = x_nchw.shape
    mid = planes                           # midchannel == planes in the module
    p1 = (mid - in_planes) // 2
    p2 = mid - planes                      # always 0 -> shortcut2 is identity
    assert p2 == 0

    # ---- stage 1 ----
    # s10 + binarize in plain JAX (values are exactly {-1,0,+1} -> bf16 is exact);
    # XLA fuses this with the channel-major im2col slicing below.
    a1 = jnp.sign(x_nchw + params["b10"][None, :, None, None])
    a1 = jnp.transpose(a1, (1, 0, 2, 3)).astype(jnp.bfloat16)       # (Cin, N, H, W)
    cols1, ho, wo = _im2col_cm(a1, stride)                          # (9*Cin, M) bf16

    w1_sign, sw1 = _binarize_weight_parts(params["w1"])
    w1_t = _wsign_to_matT(w1_sign)                                  # (mid, 9*Cin) bf16
    bn1_s, bn1_sh = _bn_fold(params["bn1_gamma"], params["bn1_beta"],
                             params["bn1_mean"], params["bn1_var"])
    pvec1 = jnp.stack([bn1_s * sw1, bn1_sh, params["b11"], params["al1"],
                       params["b12"], params["b20"]], axis=1)       # (mid, 6)

    # shortcut1(x): spatial ::2 subsample (if stride != 1) + zero channel padding.
    sc = x_nchw[:, :, ::2, ::2] if stride != 1 else x_nchw
    sc = jnp.pad(sc, ((0, 0), (p1, p1), (0, 0), (0, 0)))
    sc = jnp.transpose(sc, (1, 0, 2, 3)).reshape(mid, n * ho * wo)  # (mid, M) f32

    out1, a2 = _run_stage1(cols1, w1_t, sc, pvec1)                  # (mid, M)

    # ---- stage 2 ----
    cols2, _, _ = _im2col_cm(a2.reshape(mid, n, ho, wo), 1)         # (9*mid, M) bf16
    w2_sign, sw2 = _binarize_weight_parts(params["w2"])
    w2_t = _wsign_to_matT(w2_sign)                                  # (planes, 9*mid)
    bn2_s, bn2_sh = _bn_fold(params["bn2_gamma"], params["bn2_beta"],
                             params["bn2_mean"], params["bn2_var"])
    pvec2 = jnp.stack([bn2_s * sw2, bn2_sh, params["b21"], params["al2"],
                       params["b22"]], axis=1)                      # (planes, 5)

    out = _run_stage2(cols2, w2_t, out1, pvec2)                     # (planes, M)
    out = out.reshape(planes, n, ho, wo)
    return jnp.transpose(out, (1, 0, 2, 3))                         # NCHW


# ----------------------------- reference (pure JAX) -----------------------------

def reference_forward(x, params, in_planes, planes, stride):
    mid = planes
    p1 = (mid - in_planes) // 2
    pc = lambda v: v[None, :, None, None]
    dn = ("NCHW", "OIHW", "NCHW")

    out = x + pc(params["b10"])
    out = lax.conv_general_dilated(jnp.sign(out), _binarize_weight(params["w1"]),
                                   (stride, stride), ((1, 1), (1, 1)),
                                   dimension_numbers=dn)
    s1, sh1 = _bn_fold(params["bn1_gamma"], params["bn1_beta"],
                       params["bn1_mean"], params["bn1_var"])
    out = out * pc(s1) + pc(sh1)
    sc = x[:, :, ::2, ::2] if stride != 1 else x
    out = out + jnp.pad(sc, ((0, 0), (p1, p1), (0, 0), (0, 0)))
    out = out + pc(params["b11"])
    out = jnp.maximum(out, 0) + pc(params["al1"]) * jnp.minimum(out, 0)
    out = out + pc(params["b12"])
    x1 = out
    out = out + pc(params["b20"])
    out = lax.conv_general_dilated(jnp.sign(out), _binarize_weight(params["w2"]),
                                   (1, 1), ((1, 1), (1, 1)), dimension_numbers=dn)
    s2, sh2 = _bn_fold(params["bn2_gamma"], params["bn2_beta"],
                       params["bn2_mean"], params["bn2_var"])
    out = out * pc(s2) + pc(sh2)
    out = out + x1
    out = out + pc(params["b21"])
    out = jnp.maximum(out, 0) + pc(params["al2"]) * jnp.minimum(out, 0)
    return out + pc(params["b22"])


# ----------------------------- params -----------------------------

def init_params(key, in_planes, planes):
    mid = planes
    ks = jax.random.split(key, 16)
    rnd = lambda k, shape, s=0.1: s * jax.random.normal(k, shape, jnp.float32)
    return dict(
        b10=rnd(ks[0], (in_planes,)),
        w1=jax.random.normal(ks[1], (mid, in_planes, 3, 3), jnp.float32)
           / (3.0 * math.sqrt(in_planes)),
        bn1_gamma=1.0 + rnd(ks[2], (mid,)), bn1_beta=rnd(ks[3], (mid,)),
        bn1_mean=rnd(ks[4], (mid,)), bn1_var=jnp.abs(rnd(ks[5], (mid,))) + 1.0,
        b11=rnd(ks[6], (mid,)),
        al1=jnp.full((mid,), 0.25, jnp.float32),
        b12=rnd(ks[7], (mid,)),
        b20=rnd(ks[8], (mid,)),
        w2=jax.random.normal(ks[9], (planes, mid, 3, 3), jnp.float32)
           / (3.0 * math.sqrt(mid)),
        bn2_gamma=1.0 + rnd(ks[10], (planes,)), bn2_beta=rnd(ks[11], (planes,)),
        bn2_mean=rnd(ks[12], (planes,)), bn2_var=jnp.abs(rnd(ks[13], (planes,))) + 1.0,
        b21=rnd(ks[14], (planes,)),
        al2=jnp.full((planes,), 0.25, jnp.float32),
        b22=rnd(ks[15], (planes,)),
    )


if __name__ == "__main__":
    key = jax.random.PRNGKey(0)
    kx, kp = jax.random.split(key)

    N, Cin, H, W = 2, 4, 16, 16
    in_planes, planes, stride = 4, 8, 2   # exercises channel-pad shortcut + strided conv

    x = jax.random.normal(kx, (N, Cin, H, W), jnp.float32)
    params = init_params(kp, in_planes, planes)

    fwd = jax.jit(basic_block_1w1a_forward, static_argnums=(2, 3, 4))
    out = fwd(x, params, in_planes, planes, stride)
    out = jax.block_until_ready(out)

    ref = reference_forward(x, params, in_planes, planes, stride)
    assert out.shape == (N, planes, H // stride, W // stride), out.shape
    assert jnp.allclose(out, ref, atol=1e-3, rtol=1e-3), float(jnp.max(jnp.abs(out - ref)))

    print("KERNEL_OK")
</pallas_src>

<mosaic_0001>
module attributes {stable_mosaic.version = 11 : i64} {
  func.func @_stage1_kernel(%arg0: i32, %arg1: memref<36x128xbf16, #tpu.memory_space<vmem>>, %arg2: memref<8x36xbf16, #tpu.memory_space<vmem>>, %arg3: memref<8x128xf32, #tpu.memory_space<vmem>>, %arg4: memref<8x6xf32, #tpu.memory_space<vmem>>, %arg5: memref<8x128xf32, #tpu.memory_space<vmem>>, %arg6: memref<8x128xbf16, #tpu.memory_space<vmem>>) attributes {dimension_semantics = [#tpu.dimension_semantics<parallel>], iteration_bounds = array<i64: 1>, scalar_prefetch = 0 : i64, scratch_operands = 0 : i64, tpu.core_type = #tpu.core_type<tc>, window_params = [{transform_indices = @transform_0, window_bounds = array<i64: 36, 128>}, {pipeline_mode = #tpu.pipeline_mode<synchronous>, transform_indices = @transform_1, window_bounds = array<i64: 8, 36>}, {transform_indices = @transform_2, window_bounds = array<i64: 8, 128>}, {pipeline_mode = #tpu.pipeline_mode<synchronous>, transform_indices = @transform_3, window_bounds = array<i64: 8, 6>}, {transform_indices = @transform_4, window_bounds = array<i64: 8, 128>}, {transform_indices = @transform_5, window_bounds = array<i64: 8, 128>}]} {
    %c0 = arith.constant 0 : index
    %c0_0 = arith.constant 0 : index
    %0 = vector.load %arg2[%c0, %c0_0] : memref<8x36xbf16, #tpu.memory_space<vmem>>, vector<8x36xbf16>
    %c0_1 = arith.constant 0 : index
    %c0_2 = arith.constant 0 : index
    %1 = vector.load %arg1[%c0_1, %c0_2] : memref<36x128xbf16, #tpu.memory_space<vmem>>, vector<36x128xbf16>
    %cst = arith.constant dense<0.000000e+00> : vector<8x128xf32>
    %2 = tpu.matmul %0, %1, %cst {dimension_numbers = #tpu.dot_dimension_numbers<[1], [0], [0], [1], [0, 0, 1, 1], [], []>} : vector<8x36xbf16>, vector<36x128xbf16>, vector<8x128xf32> -> vector<8x128xf32>
    %c0_3 = arith.constant 0 : index
    %c0_4 = arith.constant 0 : index
    %3 = vector.load %arg4[%c0_3, %c0_4] : memref<8x6xf32, #tpu.memory_space<vmem>>, vector<8x6xf32>
    %4 = vector.extract_strided_slice %3 {offsets = [0, 0], sizes = [8, 1], strides = [1, 1]} : vector<8x6xf32> to vector<8x1xf32>
    %5 = vector.extract_strided_slice %3 {offsets = [0, 1], sizes = [8, 1], strides = [1, 1]} : vector<8x6xf32> to vector<8x1xf32>
    %6 = vector.extract_strided_slice %3 {offsets = [0, 2], sizes = [8, 1], strides = [1, 1]} : vector<8x6xf32> to vector<8x1xf32>
    %7 = vector.extract_strided_slice %3 {offsets = [0, 3], sizes = [8, 1], strides = [1, 1]} : vector<8x6xf32> to vector<8x1xf32>
    %8 = vector.extract_strided_slice %3 {offsets = [0, 4], sizes = [8, 1], strides = [1, 1]} : vector<8x6xf32> to vector<8x1xf32>
    %9 = vector.extract_strided_slice %3 {offsets = [0, 5], sizes = [8, 1], strides = [1, 1]} : vector<8x6xf32> to vector<8x1xf32>
    %10 = vector.broadcast %4 : vector<8x1xf32> to vector<8x128xf32>
    %11 = arith.mulf %2, %10 : vector<8x128xf32>
    %12 = vector.broadcast %5 : vector<8x1xf32> to vector<8x128xf32>
    %13 = arith.addf %11, %12 : vector<8x128xf32>
    %c0_5 = arith.constant 0 : index
    %c0_6 = arith.constant 0 : index
    %14 = vector.load %arg3[%c0_5, %c0_6] : memref<8x128xf32, #tpu.memory_space<vmem>>, vector<8x128xf32>
    %15 = arith.addf %13, %14 : vector<8x128xf32>
    %16 = vector.broadcast %6 : vector<8x1xf32> to vector<8x128xf32>
    %17 = arith.addf %15, %16 : vector<8x128xf32>
    %cst_7 = arith.constant 0.000000e+00 : f32
    %18 = vector.broadcast %cst_7 : f32 to vector<8x128xf32>
    %19 = arith.cmpf ogt, %17, %18 : vector<8x128xf32>
    %20 = vector.broadcast %7 : vector<8x1xf32> to vector<8x128xf32>
    %21 = arith.mulf %20, %17 : vector<8x128xf32>
    %22 = arith.select %19, %17, %21 : vector<8x128xi1>, vector<8x128xf32>
    %23 = vector.broadcast %8 : vector<8x1xf32> to vector<8x128xf32>
    %24 = arith.addf %22, %23 : vector<8x128xf32>
    %c0_8 = arith.constant 0 : index
    %c0_9 = arith.constant 0 : index
    %25 = vector.load %arg5[%c0_8, %c0_9] : memref<8x128xf32, #tpu.memory_space<vmem>>, vector<8x128xf32>
    tpu.vector_store %arg5[%c0_8, %c0_9], %24 {strides = array<i32>} : memref<8x128xf32, #tpu.memory_space<vmem>>, vector<8x128xf32>,
    %26 = vector.broadcast %9 : vector<8x1xf32> to vector<8x128xf32>
    %27 = arith.addf %24, %26 : vector<8x128xf32>
    %cst_10 = arith.constant 0.000000e+00 : f32
    %28 = vector.broadcast %cst_10 : f32 to vector<8x128xf32>
    %29 = arith.cmpf ogt, %27, %28 : vector<8x128xf32>
    %cst_11 = arith.constant 0.000000e+00 : f32
    %30 = vector.broadcast %cst_11 : f32 to vector<8x128xf32>
    %31 = arith.cmpf olt, %27, %30 : vector<8x128xf32>
    %cst_12 = arith.constant -1.000000e+00 : f32
    %cst_13 = arith.constant 0.000000e+00 : f32
    %32 = vector.broadcast %cst_12 : f32 to vector<8x128xf32>
    %33 = vector.broadcast %cst_13 : f32 to vector<8x128xf32>
    %34 = arith.select %31, %32, %33 : vector<8x128xi1>, vector<8x128xf32>
    %cst_14 = arith.constant 1.000000e+00 : f32
    %35 = vector.broadcast %cst_14 : f32 to vector<8x128xf32>
    %36 = arith.select %29, %35, %34 : vector<8x128xi1>, vector<8x128xf32>
    %37 = arith.truncf %36 : vector<8x128xf32> to vector<8x128xbf16>
    %c0_15 = arith.constant 0 : index
    %c0_16 = arith.constant 0 : index
    %38 = vector.load %arg6[%c0_15, %c0_16] : memref<8x128xbf16, #tpu.memory_space<vmem>>, vector<8x128xbf16>
    tpu.vector_store %arg6[%c0_15, %c0_16], %37 {strides = array<i32>} : memref<8x128xbf16, #tpu.memory_space<vmem>>, vector<8x128xbf16>,
    return
  }
  func.func @transform_0(%arg0: i32) -> (i32, i32) {
    %c0_i32 = arith.constant 0 : i32
    %c0_i32_0 = arith.constant 0 : i32
    return %c0_i32, %arg0 : i32, i32
  }
  func.func @transform_1(%arg0: i32) -> (i32, i32) {
    %c0_i32 = arith.constant 0 : i32
    %c0_i32_0 = arith.constant 0 : i32
    %c0_i32_1 = arith.constant 0 : i32
    return %c0_i32, %c0_i32_0 : i32, i32
  }
  func.func @transform_2(%arg0: i32) -> (i32, i32) {
    %c0_i32 = arith.constant 0 : i32
    %c0_i32_0 = arith.constant 0 : i32
    return %c0_i32, %arg0 : i32, i32
  }
  func.func @transform_3(%arg0: i32) -> (i32, i32) {
    %c0_i32 = arith.constant 0 : i32
    %c0_i32_0 = arith.constant 0 : i32
    %c0_i32_1 = arith.constant 0 : i32
    return %c0_i32, %c0_i32_0 : i32, i32
  }
  func.func @transform_4(%arg0: i32) -> (i32, i32) {
    %c0_i32 = arith.constant 0 : i32
    %c0_i32_0 = arith.constant 0 : i32
    return %c0_i32, %arg0 : i32, i32
  }
  func.func @transform_5(%arg0: i32) -> (i32, i32) {
    %c0_i32 = arith.constant 0 : i32
    %c0_i32_0 = arith.constant 0 : i32
    return %c0_i32, %arg0 : i32, i32
  }
}

module attributes {stable_mosaic.version = 11 : i64} {
  func.func @_stage2_kernel(%arg0: i32, %arg1: memref<72x128xbf16, #tpu.memory_space<vmem>>, %arg2: memref<8x72xbf16, #tpu.memory_space<vmem>>, %arg3: memref<8x128xf32, #tpu.memory_space<vmem>>, %arg4: memref<8x5xf32, #tpu.memory_space<vmem>>, %arg5: memref<8x128xf32, #tpu.memory_space<vmem>>) attributes {dimension_semantics = [#tpu.dimension_semantics<parallel>], iteration_bounds = array<i64: 1>, scalar_prefetch = 0 : i64, scratch_operands = 0 : i64, tpu.core_type = #tpu.core_type<tc>, window_params = [{transform_indices = @transform_0, window_bounds = array<i64: 72, 128>}, {pipeline_mode = #tpu.pipeline_mode<synchronous>, transform_indices = @transform_1, window_bounds = array<i64: 8, 72>}, {transform_indices = @transform_2, window_bounds = array<i64: 8, 128>}, {pipeline_mode = #tpu.pipeline_mode<synchronous>, transform_indices = @transform_3, window_bounds = array<i64: 8, 5>}, {transform_indices = @transform_4, window_bounds = array<i64: 8, 128>}]} {
    %c0 = arith.constant 0 : index
    %c0_0 = arith.constant 0 : index
    %0 = vector.load %arg2[%c0, %c0_0] : memref<8x72xbf16, #tpu.memory_space<vmem>>, vector<8x72xbf16>
    %c0_1 = arith.constant 0 : index
    %c0_2 = arith.constant 0 : index
    %1 = vector.load %arg1[%c0_1, %c0_2] : memref<72x128xbf16, #tpu.memory_space<vmem>>, vector<72x128xbf16>
    %cst = arith.constant dense<0.000000e+00> : vector<8x128xf32>
    %2 = tpu.matmul %0, %1, %cst {dimension_numbers = #tpu.dot_dimension_numbers<[1], [0], [0], [1], [0, 0, 1, 1], [], []>} : vector<8x72xbf16>, vector<72x128xbf16>, vector<8x128xf32> -> vector<8x128xf32>
    %c0_3 = arith.constant 0 : index
    %c0_4 = arith.constant 0 : index
    %3 = vector.load %arg4[%c0_3, %c0_4] : memref<8x5xf32, #tpu.memory_space<vmem>>, vector<8x5xf32>
    %4 = vector.extract_strided_slice %3 {offsets = [0, 0], sizes = [8, 1], strides = [1, 1]} : vector<8x5xf32> to vector<8x1xf32>
    %5 = vector.extract_strided_slice %3 {offsets = [0, 1], sizes = [8, 1], strides = [1, 1]} : vector<8x5xf32> to vector<8x1xf32>
    %6 = vector.extract_strided_slice %3 {offsets = [0, 2], sizes = [8, 1], strides = [1, 1]} : vector<8x5xf32> to vector<8x1xf32>
    %7 = vector.extract_strided_slice %3 {offsets = [0, 3], sizes = [8, 1], strides = [1, 1]} : vector<8x5xf32> to vector<8x1xf32>
    %8 = vector.extract_strided_slice %3 {offsets = [0, 4], sizes = [8, 1], strides = [1, 1]} : vector<8x5xf32> to vector<8x1xf32>
    %9 = vector.broadcast %4 : vector<8x1xf32> to vector<8x128xf32>
    %10 = arith.mulf %2, %9 : vector<8x128xf32>
    %11 = vector.broadcast %5 : vector<8x1xf32> to vector<8x128xf32>
    %12 = arith.addf %10, %11 : vector<8x128xf32>
    %c0_5 = arith.constant 0 : index
    %c0_6 = arith.constant 0 : index
    %13 = vector.load %arg3[%c0_5, %c0_6] : memref<8x128xf32, #tpu.memory_space<vmem>>, vector<8x128xf32>
    %14 = arith.addf %12, %13 : vector<8x128xf32>
    %15 = vector.broadcast %6 : vector<8x1xf32> to vector<8x128xf32>
    %16 = arith.addf %14, %15 : vector<8x128xf32>
    %cst_7 = arith.constant 0.000000e+00 : f32
    %17 = vector.broadcast %cst_7 : f32 to vector<8x128xf32>
    %18 = arith.cmpf ogt, %16, %17 : vector<8x128xf32>
    %19 = vector.broadcast %7 : vector<8x1xf32> to vector<8x128xf32>
    %20 = arith.mulf %19, %16 : vector<8x128xf32>
    %21 = arith.select %18, %16, %20 : vector<8x128xi1>, vector<8x128xf32>
    %22 = vector.broadcast %8 : vector<8x1xf32> to vector<8x128xf32>
    %23 = arith.addf %21, %22 : vector<8x128xf32>
    %c0_8 = arith.constant 0 : index
    %c0_9 = arith.constant 0 : index
    %24 = vector.load %arg5[%c0_8, %c0_9] : memref<8x128xf32, #tpu.memory_space<vmem>>, vector<8x128xf32>
    tpu.vector_store %arg5[%c0_8, %c0_9], %23 {strides = array<i32>} : memref<8x128xf32, #tpu.memory_space<vmem>>, vector<8x128xf32>,
    return
  }
  func.func @transform_0(%arg0: i32) -> (i32, i32) {
    %c0_i32 = arith.constant 0 : i32
    %c0_i32_0 = arith.constant 0 : i32
    return %c0_i32, %arg0 : i32, i32
  }
  func.func @transform_1(%arg0: i32) -> (i32, i32) {
    %c0_i32 = arith.constant 0 : i32
    %c0_i32_0 = arith.constant 0 : i32
    %c0_i32_1 = arith.constant 0 : i32
    return %c0_i32, %c0_i32_0 : i32, i32
  }
  func.func @transform_2(%arg0: i32) -> (i32, i32) {
    %c0_i32 = arith.constant 0 : i32
    %c0_i32_0 = arith.constant 0 : i32
    return %c0_i32, %arg0 : i32, i32
  }
  func.func @transform_3(%arg0: i32) -> (i32, i32) {
    %c0_i32 = arith.constant 0 : i32
    %c0_i32_0 = arith.constant 0 : i32
    %c0_i32_1 = arith.constant 0 : i32
    return %c0_i32, %c0_i32_0 : i32, i32
  }
  func.func @transform_4(%arg0: i32) -> (i32, i32) {
    %c0_i32 = arith.constant 0 : i32
    %c0_i32_0 = arith.constant 0 : i32
    return %c0_i32, %arg0 : i32, i32
  }
}

</mosaic_0001>

<llo_original>
// kernel: basic_block_1w1a_forward.2
$region0: #{basic_block_1w1a_forward.2}
  #allocation0 [shape = 'u32[]', space=smem, size = 0x4, offset = 0x4, fixed_abs, tag = 'smem constant byte address 0x4 - core index']
  #allocation1 [shape = 'u32[144,128]{1,0:T(1,128)}', space=vmem, size = 0x12000, scoped, tag = 'internal scratch']
  %s0 = inlined_call_operand.vmem [shape: bf16[36,128], index: 0, kind: input, shape index: {}]
  %s1 = inlined_call_operand.vmem [shape: bf16[8,36], index: 1, kind: input, shape index: {}]
  %s2 = inlined_call_operand.vmem [shape: f32[8,128], index: 2, kind: input, shape index: {}]
  %s3 = inlined_call_operand.vmem [shape: f32[8,6], index: 3, kind: input, shape index: {}]
  %s4 = inlined_call_operand.vmem [shape: f32[8,128], index: 4, kind: output, shape index: {0}]
  %s5 = inlined_call_operand.vmem [shape: bf16[8,128], index: 5, kind: output, shape index: {1}]
  %6 = xla_tuple %s4, %s5
  %s7 = sld [smem:[#allocation0]]
  $region34: #{basic_block_1w1a_forward.2} parent=0
    _
  %s9 = ssub.s32 1, %s7
  %s10 = scalar_select 0, %s9, %s7
  // Predicated region
  $region2: #{basic_block_1w1a_forward.2} parent=0 // pred_check
    _
  $region3: #{basic_block_1w1a_forward.2} parent=0 // pred_check_branch
    %12 = sbr.rel (0) target = $region5
  $region4: #{basic_block_1w1a_forward.2} parent=0 // pred_region
    _
  $region5: #{basic_block_1w1a_forward.2} parent=0 // pred_fallthru
    _
  // Predicated region
  $region6: #{basic_block_1w1a_forward.2} parent=0 // pred_check
    _
  $region7: #{basic_block_1w1a_forward.2} parent=0 // pred_check_branch
    %14 = sbr.rel (0) target = $region9
  $region8: #{basic_block_1w1a_forward.2} parent=0 // pred_region
    _
  $region9: #{basic_block_1w1a_forward.2} parent=0 // pred_fallthru
    _
  // Predicated region
  $region10: #{basic_block_1w1a_forward.2} parent=0 // pred_check
    _
  $region11: #{basic_block_1w1a_forward.2} parent=0 // pred_check_branch
    %16 = sbr.rel (0) target = $region13
  $region12: #{basic_block_1w1a_forward.2} parent=0 // pred_region
    _
  $region13: #{basic_block_1w1a_forward.2} parent=0 // pred_fallthru
    _
  // Predicated region
  $region14: #{basic_block_1w1a_forward.2} parent=0 // pred_check
    _
  $region15: #{basic_block_1w1a_forward.2} parent=0 // pred_check_branch
    %18 = sbr.rel (0) target = $region17
  $region16: #{basic_block_1w1a_forward.2} parent=0 // pred_region
    _
  $region17: #{basic_block_1w1a_forward.2} parent=0 // pred_fallthru
    _
  %v20 = vld [vmem:[%s1] sm:$0xf]
  %v21 = vld [vmem:[%s0] sm:$0xf]
  %v22 = vld [vmem:[%s0 + $0x4] sm:$0xf]
  %v23 = vld [vmem:[%s0 + $0x8] sm:$0xf]
  %v24 = vld [vmem:[%s0 + $0xc] sm:$0xf]
  %v25 = vld [vmem:[%s0 + $0x10] sm:$0x3]
  %v31 = vunpack.c.l.b16 %v21
  %v32 = vunpack.c.l.b16 %v22
  %v33 = vunpack.c.l.b16 %v23
  %v34 = vunpack.c.l.b16 %v24
  %v35 = vunpack.c.l.b16 %v25
  %v36 = vpack.c.b16 %v32, %v31
  %v37 = vpack.c.b16 %v34, %v33
  %v38 = vpack.c.b16 %v35, %v35
  %vm41 = vcmask 293888
  %v43 = vsel %vm41, %v20, 0
  %vm45 = vcmask 1041408
  %v47 = vsel %vm45, %v38, 0
  %49 = vmatprep.subr.bf16.mxu0 0
  %50 = vmatpush1.bf16.msra.mxu0 %v36
  %51 = vmatprep.subr.bf16.mxu0 0
  %52 = vmatpush1.bf16.msra.mxu0 %v37
  %53 = vmatprep.subr.bf16.mxu0 0
  %54 = vmatpush1.bf16.msra.mxu0 %v47
  %55 = vmatprep.subr.bf16.mxu0 0
  %56 = vmatpush1.bf16.msra.mxu0 0
  %57 = vmatprep.subr.bf16.mxu0 0
  %58 = vmatpush1.bf16.msra.mxu0 0
  %59 = vmatprep.subr.bf16.mxu0 0
  %60 = vmatpush1.bf16.msra.mxu0 0
  %61 = vmatprep.subr.bf16.mxu0 0
  %62 = vmatpush1.bf16.msra.mxu0 0
  %63 = vmatprep.subr.bf16.mxu0 0
  %64 = vmatpush1.bf16.msra.mxu0 0
  %65 = vmatprep.subr.bf16.mxu0 0
  %66 = vmatpush1.bf16.msra.mxu0 0
  %67 = vmatprep.subr.bf16.mxu0 0
  %68 = vmatpush1.bf16.msra.mxu0 0
  %69 = vmatprep.subr.bf16.mxu0 0
  %70 = vmatpush1.bf16.msra.mxu0 0
  %71 = vmatprep.subr.bf16.mxu0 0
  %72 = vmatpush1.bf16.msra.mxu0 0
  %73 = vmatprep.subr.bf16.mxu0 0
  %74 = vmatpush1.bf16.msra.mxu0 0
  %75 = vmatprep.subr.bf16.mxu0 0
  %76 = vmatpush1.bf16.msra.mxu0 0
  %77 = vmatprep.subr.bf16.mxu0 0
  %78 = vmatpush1.bf16.msra.mxu0 0
  %79 = vmatprep.subr.bf16.mxu0 0
  %80 = vmatpush1.bf16.msra.mxu0 0
  %81 = vmatprep.mubr.bf16.mxu0 0
  %82 = vmatmul.mubr.bf16.gmra.mrb[0].mxu0 %v43
  %v83 = vpop.f32.mrb[0].mxu0
  %v84 = vadd.f32 0.0, %v83
  %v85 = vpop.f32.mrb[0].mxu0
  %v86 = vpop.f32.mrb[0].mxu0
  %v87 = vpop.f32.mrb[0].mxu0
  %88 = vdwg.mxu0
  %v89 = vld [vmem:[%s3] sm:$0xff]
  %91 = vset.pattern.permute.xlu0 0
  %92 = vperm.xlu0 %91, %v89
  %v93 = vpop.permute.xlu0 %92
  %v95 = vmul.f32 %v84, %v93
  %96 = vset.pattern.permute.xlu0 1
  %97 = vperm.xlu0 %96, %v89
  %v98 = vpop.permute.xlu0 %97
  %v100 = vadd.f32 %v95, %v98
  %v101 = vld [vmem:[%s2] sm:$0xff]
  %v102 = vadd.f32 %v100, %v101
  %103 = vset.pattern.permute.xlu0 2
  %104 = vperm.xlu0 %103, %v89
  %v105 = vpop.permute.xlu0 %104
  %v107 = vadd.f32 %v102, %v105
  %vm108 = vcmp.gt.f32.partialorder %v107, 0.0
  %109 = vset.pattern.permute.xlu0 3
  %110 = vperm.xlu0 %109, %v89
  %v111 = vpop.permute.xlu0 %110
  %v113 = vmul.f32 %v111, %v107
  %v114 = vsel %vm108, %v107, %v113
  %115 = vset.pattern.permute.xlu0 4
  %116 = vperm.xlu0 %115, %v89
  %v117 = vpop.permute.xlu0 %116
  %v119 = vadd.f32 %v114, %v117
  %120 = vst [vmem:[%s4] sm:$0xff] %v119
  %121 = vset.pattern.permute.xlu0 5
  %122 = vperm.xlu0 %121, %v89
  %v123 = vpop.permute.xlu0 %122
  %v125 = vadd.f32 %v119, %v123
  %vm126 = vcmp.gt.f32.partialorder %v125, 0.0
  %vm127 = vcmp.lt.f32.partialorder %v125, 0.0
  %v128 = vsel %vm127, -1.0, 0.0
  %v129 = vsel %vm126, 1.0, %v128
  %v130 = vpack.c.bf16 %v129, %v129
  %131 = vst [vmem:[%s5] sm:$0xf] %v130
  // Predicated region
  $region18: #{basic_block_1w1a_forward.2} parent=0 // pred_check
    _
  $region19: #{basic_block_1w1a_forward.2} parent=0 // pred_check_branch
    %133 = sbr.rel (0) target = $region21
  $region20: #{basic_block_1w1a_forward.2} parent=0 // pred_region
    _
  $region21: #{basic_block_1w1a_forward.2} parent=0 // pred_fallthru
    _
  // Predicated region
  $region22: #{basic_block_1w1a_forward.2} parent=0 // pred_check
    _
  $region23: #{basic_block_1w1a_forward.2} parent=0 // pred_check_branch
    %135 = sbr.rel (0) target = $region25
  $region24: #{basic_block_1w1a_forward.2} parent=0 // pred_region
    _
  $region25: #{basic_block_1w1a_forward.2} parent=0 // pred_fallthru
    _
  // Predicated region
  $region26: #{basic_block_1w1a_forward.2} parent=0 // pred_check
    _
  $region27: #{basic_block_1w1a_forward.2} parent=0 // pred_check_branch
    %137 = sbr.rel (0) target = $region29
  $region28: #{basic_block_1w1a_forward.2} parent=0 // pred_region
    _
  $region29: #{basic_block_1w1a_forward.2} parent=0 // pred_fallthru
    _
  // Predicated region
  $region30: #{basic_block_1w1a_forward.2} parent=0 // pred_check
    _
  $region31: #{basic_block_1w1a_forward.2} parent=0 // pred_check_branch
    %139 = sbr.rel (0) target = $region33
  $region32: #{basic_block_1w1a_forward.2} parent=0 // pred_region
    _
  $region33: #{basic_block_1w1a_forward.2} parent=0 // pred_fallthru
    _

// kernel: basic_block_1w1a_forward.3
$region0: #{basic_block_1w1a_forward.3}
  #allocation0 [shape = 'u32[]', space=smem, size = 0x4, offset = 0x4, fixed_abs, tag = 'smem constant byte address 0x4 - core index']
  #allocation1 [shape = 'u32[144,128]{1,0:T(1,128)}', space=vmem, size = 0x12000, scoped, tag = 'internal scratch']
  %s0 = inlined_call_operand.vmem [shape: bf16[72,128], index: 0, kind: input, shape index: {}]
  %s1 = inlined_call_operand.vmem [shape: bf16[8,72], index: 1, kind: input, shape index: {}]
  %s2 = inlined_call_operand.vmem [shape: f32[8,128], index: 2, kind: input, shape index: {}]
  %s3 = inlined_call_operand.vmem [shape: f32[8,5], index: 3, kind: input, shape index: {}]
  %s4 = inlined_call_operand.vmem [shape: f32[8,128], index: 4, kind: output, shape index: {}]
  %s5 = sld [smem:[#allocation0]]
  $region26: #{basic_block_1w1a_forward.3} parent=0
    _
  %s7 = ssub.s32 1, %s5
  %s8 = scalar_select 0, %s7, %s5
  // Predicated region
  $region2: #{basic_block_1w1a_forward.3} parent=0 // pred_check
    _
  $region3: #{basic_block_1w1a_forward.3} parent=0 // pred_check_branch
    %10 = sbr.rel (0) target = $region5
  $region4: #{basic_block_1w1a_forward.3} parent=0 // pred_region
    _
  $region5: #{basic_block_1w1a_forward.3} parent=0 // pred_fallthru
    _
  // Predicated region
  $region6: #{basic_block_1w1a_forward.3} parent=0 // pred_check
    _
  $region7: #{basic_block_1w1a_forward.3} parent=0 // pred_check_branch
    %12 = sbr.rel (0) target = $region9
  $region8: #{basic_block_1w1a_forward.3} parent=0 // pred_region
    _
  $region9: #{basic_block_1w1a_forward.3} parent=0 // pred_fallthru
    _
  // Predicated region
  $region10: #{basic_block_1w1a_forward.3} parent=0 // pred_check
    _
  $region11: #{basic_block_1w1a_forward.3} parent=0 // pred_check_branch
    %14 = sbr.rel (0) target = $region13
  $region12: #{basic_block_1w1a_forward.3} parent=0 // pred_region
    _
  $region13: #{basic_block_1w1a_forward.3} parent=0 // pred_fallthru
    _
  // Predicated region
  $region14: #{basic_block_1w1a_forward.3} parent=0 // pred_check
    _
  $region15: #{basic_block_1w1a_forward.3} parent=0 // pred_check_branch
    %16 = sbr.rel (0) target = $region17
  $region16: #{basic_block_1w1a_forward.3} parent=0 // pred_region
    _
  $region17: #{basic_block_1w1a_forward.3} parent=0 // pred_fallthru
    _
  %v18 = vld [vmem:[%s1] sm:$0xf]
  %v19 = vld [vmem:[%s0] sm:$0xf]
  %v20 = vld [vmem:[%s0 + $0x4] sm:$0xf]
  %v21 = vld [vmem:[%s0 + $0x8] sm:$0xf]
  %v22 = vld [vmem:[%s0 + $0xc] sm:$0xf]
  %v23 = vld [vmem:[%s0 + $0x10] sm:$0xf]
  %v24 = vld [vmem:[%s0 + $0x14] sm:$0xf]
  %v25 = vld [vmem:[%s0 + $0x18] sm:$0xf]
  %v26 = vld [vmem:[%s0 + $0x1c] sm:$0xf]
  %v27 = vld [vmem:[%s0 + $0x20] sm:$0xf]
  %v37 = vunpack.c.l.b16 %v19
  %v38 = vunpack.c.l.b16 %v20
  %v39 = vunpack.c.l.b16 %v21
  %v40 = vunpack.c.l.b16 %v22
  %v41 = vunpack.c.l.b16 %v23
  %v42 = vunpack.c.l.b16 %v24
  %v43 = vunpack.c.l.b16 %v25
  %v44 = vunpack.c.l.b16 %v26
  %v45 = vunpack.c.l.b16 %v27
  %v46 = vpack.c.b16 %v38, %v37
  %v47 = vpack.c.b16 %v40, %v39
  %v48 = vpack.c.b16 %v42, %v41
  %v49 = vpack.c.b16 %v44, %v43
  %v50 = vpack.c.b16 %v45, %v45
  %vm55 = vcmask 588800
  %v57 = vsel %vm55, %v18, 0
  %vm59 = vcmask 1043456
  %v61 = vsel %vm59, %v50, 0
  %63 = vmatprep.subr.bf16.mxu0 0
  %64 = vmatpush1.bf16.msra.mxu0 %v46
  %65 = vmatprep.subr.bf16.mxu0 0
  %66 = vmatpush1.bf16.msra.mxu0 %v47
  %67 = vmatprep.subr.bf16.mxu0 0
  %68 = vmatpush1.bf16.msra.mxu0 %v48
  %69 = vmatprep.subr.bf16.mxu0 0
  %70 = vmatpush1.bf16.msra.mxu0 %v49
  %71 = vmatprep.subr.bf16.mxu0 0
  %72 = vmatpush1.bf16.msra.mxu0 %v61
  %73 = vmatprep.subr.bf16.mxu0 0
  %74 = vmatpush1.bf16.msra.mxu0 0
  %75 = vmatprep.subr.bf16.mxu0 0
  %76 = vmatpush1.bf16.msra.mxu0 0
  %77 = vmatprep.subr.bf16.mxu0 0
  %78 = vmatpush1.bf16.msra.mxu0 0
  %79 = vmatprep.subr.bf16.mxu0 0
  %80 = vmatpush1.bf16.msra.mxu0 0
  %81 = vmatprep.subr.bf16.mxu0 0
  %82 = vmatpush1.bf16.msra.mxu0 0
  %83 = vmatprep.subr.bf16.mxu0 0
  %84 = vmatpush1.bf16.msra.mxu0 0
  %85 = vmatprep.subr.bf16.mxu0 0
  %86 = vmatpush1.bf16.msra.mxu0 0
  %87 = vmatprep.subr.bf16.mxu0 0
  %88 = vmatpush1.bf16.msra.mxu0 0
  %89 = vmatprep.subr.bf16.mxu0 0
  %90 = vmatpush1.bf16.msra.mxu0 0
  %91 = vmatprep.subr.bf16.mxu0 0
  %92 = vmatpush1.bf16.msra.mxu0 0
  %93 = vmatprep.subr.bf16.mxu0 0
  %94 = vmatpush1.bf16.msra.mxu0 0
  %95 = vmatprep.mubr.bf16.mxu0 0
  %96 = vmatmul.mubr.bf16.gmra.mrb[0].mxu0 %v57
  %v97 = vpop.f32.mrb[0].mxu0
  %v98 = vadd.f32 0.0, %v97
  %v99 = vpop.f32.mrb[0].mxu0
  %v100 = vpop.f32.mrb[0].mxu0
  %v101 = vpop.f32.mrb[0].mxu0
  %102 = vdwg.mxu0
  %v103 = vld [vmem:[%s3] sm:$0xff]
  %105 = vset.pattern.permute.xlu0 0
  %106 = vperm.xlu0 %105, %v103
  %v107 = vpop.permute.xlu0 %106
  %v109 = vmul.f32 %v98, %v107
  %110 = vset.pattern.permute.xlu0 1
  %111 = vperm.xlu0 %110, %v103
  %v112 = vpop.permute.xlu0 %111
  %v114 = vadd.f32 %v109, %v112
  %v115 = vld [vmem:[%s2] sm:$0xff]
  %v116 = vadd.f32 %v114, %v115
  %117 = vset.pattern.permute.xlu0 2
  %118 = vperm.xlu0 %117, %v103
  %v119 = vpop.permute.xlu0 %118
  %v121 = vadd.f32 %v116, %v119
  %vm122 = vcmp.gt.f32.partialorder %v121, 0.0
  %123 = vset.pattern.permute.xlu0 3
  %124 = vperm.xlu0 %123, %v103
  %v125 = vpop.permute.xlu0 %124
  %v127 = vmul.f32 %v125, %v121
  %v128 = vsel %vm122, %v121, %v127
  %129 = vset.pattern.permute.xlu0 4
  %130 = vperm.xlu0 %129, %v103
  %v131 = vpop.permute.xlu0 %130
  %v133 = vadd.f32 %v128, %v131
  %134 = vst [vmem:[%s4] sm:$0xff] %v133
  // Predicated region
  $region18: #{basic_block_1w1a_forward.3} parent=0 // pred_check
    _
  $region19: #{basic_block_1w1a_forward.3} parent=0 // pred_check_branch
    %136 = sbr.rel (0) target = $region21
  $region20: #{basic_block_1w1a_forward.3} parent=0 // pred_region
    _
  $region21: #{basic_block_1w1a_forward.3} parent=0 // pred_fallthru
    _
  // Predicated region
  $region22: #{basic_block_1w1a_forward.3} parent=0 // pred_check
    _
  $region23: #{basic_block_1w1a_forward.3} parent=0 // pred_check_branch
    %138 = sbr.rel (0) target = $region25
  $region24: #{basic_block_1w1a_forward.3} parent=0 // pred_region
    _
  $region25: #{basic_block_1w1a_forward.3} parent=0 // pred_fallthru
    _

</llo_original>
